<compile_context>
chip_gen: v6e
topology: v6e:2x2x1
jax: 0.10.0
libtpu: 0.0.40
codegen_flags: <defaults>
</compile_context>

<pallas_src>
import jax
import jax.numpy as jnp
from jax import lax
from jax.experimental import pallas as pl
from jax.experimental.pallas import tpu as pltpu

HIDDEN = 30   # hidden width fixed by the torch module
HPAD = 32     # padded to a whole number of f32 sublane groups (8)


def _resnet_kernel(x_ref, w1_ref, wmid_ref, misc_ref, o_ref):
    """Fused 5-Linear / 4-ReLU MLP + residual-of-last-feature (batch on lanes).

    x_ref    : (TILE_B, in_size) f32   input block in its natural layout
    w1_ref   : (HPAD, in_size)   f32   layer-1 weight; row 30 = one-hot(last feat)
    wmid_ref : (3, HPAD, HPAD)   f32   layers 2..4 stacked, zero-padded 30->32
    misc_ref : (HPAD, 8)         f32   cols 0..4 = biases of layers 1..5,
                                       col 5 = layer-5 weight column, rest 0
    o_ref    : (1, TILE_B)       f32
    """
    x = x_ref[...]
    misc = misc_ref[...]
    b1 = misc[:, 0:1]
    b2 = misc[:, 1:2]
    b3 = misc[:, 2:3]
    b4 = misc[:, 3:4]
    b5 = misc[0:1, 4:5]
    w5 = misc[:, 5:6]

    # Layer 1: contract the feature axis of x directly (A @ B^T form), so the
    # batch-on-lanes "transpose" is folded into the MXU op -- no HBM transpose
    # pass in the wrapper and no separate in-kernel transpose.  Row 30 of w1 is
    # a one-hot selector of the last input feature, so the residual term rides
    # along in the same matmul for free.
    h = lax.dot_general(
        w1_ref[...], x,
        dimension_numbers=(((1,), (1,)), ((), ())),
        preferred_element_type=jnp.float32) + b1          # (HPAD, TILE_B)
    x_curr = h[HIDDEN:HIDDEN + 1, :]                       # residual row, pre-ReLU
    h = jnp.maximum(h, 0.0)

    h = jnp.maximum(
        jnp.dot(wmid_ref[0], h, preferred_element_type=jnp.float32) + b2, 0.0)
    h = jnp.maximum(
        jnp.dot(wmid_ref[1], h, preferred_element_type=jnp.float32) + b3, 0.0)
    h = jnp.maximum(
        jnp.dot(wmid_ref[2], h, preferred_element_type=jnp.float32) + b4, 0.0)

    # Final 30->1 layer: M=1 would waste an MXU push; use VPU mul + sublane
    # reduction instead (padded rows of w5 are zero).
    out = jnp.sum(w5 * h, axis=0, keepdims=True) + b5      # (1, TILE_B)

    o_ref[...] = x_curr + out


def _pack_params(params, in_size):
    """Pack 10 torch-layout (W, b) operands into 3 dense, HPAD-padded arrays."""
    w1 = params[0][0].astype(jnp.float32).reshape(HIDDEN, in_size)
    sel = jnp.zeros((1, in_size), jnp.float32).at[0, in_size - 1].set(1.0)
    w1_pack = jnp.concatenate(
        [w1, sel, jnp.zeros((HPAD - HIDDEN - 1, in_size), jnp.float32)], axis=0)

    wmid = jnp.stack([params[1][0], params[2][0], params[3][0]], axis=0)
    wmid_pack = jnp.pad(wmid.astype(jnp.float32),
                        ((0, 0), (0, HPAD - HIDDEN), (0, HPAD - HIDDEN)))

    w5_col = jnp.pad(params[4][0].astype(jnp.float32).reshape(-1),
                     (0, HPAD - HIDDEN))

    cols = [jnp.pad(b.astype(jnp.float32), (0, HPAD - b.shape[0]))
            for (_, b) in params]                          # 5 bias columns
    cols.append(w5_col)                                    # col 5: W5 as a column
    cols.append(jnp.zeros((HPAD,), jnp.float32))
    cols.append(jnp.zeros((HPAD,), jnp.float32))
    misc_pack = jnp.stack(cols, axis=1)                    # (HPAD, 8)
    return w1_pack, wmid_pack, misc_pack


def resnet_forward(x, params, *, tile_b=2048):
    """x: (B, input_size) -> (B, 1).  params: list of 5 (W(out,in), b(out,))."""
    x = x.astype(jnp.float32)
    B, in_size = x.shape
    w1_pack, wmid_pack, misc_pack = _pack_params(params, in_size)

    # --- Lane-aligned batch tiling. ---
    tile_b = max(128, pl.cdiv(int(tile_b), 128) * 128)      # force 128-multiple
    b_min = pl.cdiv(B, 128) * 128                           # minimal padded batch
    tile_b = min(tile_b, b_min)
    if b_min >= 2 * 128:
        # Keep the grid >= 2 so both v7x TensorCores get work (parallel axis);
        # the extra ~0.35us step is noise on v5e/v6e.
        half = pl.cdiv(pl.cdiv(b_min, 2), 128) * 128
        tile_b = min(tile_b, half)
    b_pad = pl.cdiv(B, tile_b) * tile_b

    x_pad = jnp.pad(x, ((0, b_pad - B), (0, 0)))            # no transpose pass

    const2 = lambda i: (0, 0)
    out = pl.pallas_call(
        _resnet_kernel,
        out_shape=jax.ShapeDtypeStruct((1, b_pad), jnp.float32),
        grid_spec=pltpu.PrefetchScalarGridSpec(
            num_scalar_prefetch=0,
            grid=(b_pad // tile_b,),
            in_specs=[
                pl.BlockSpec((tile_b, in_size), lambda i: (i, 0)),   # x tile
                pl.BlockSpec((HPAD, in_size), const2),               # W1 (resident)
                pl.BlockSpec((3, HPAD, HPAD), lambda i: (0, 0, 0)),  # W2..W4
                pl.BlockSpec((HPAD, 8), const2),                     # biases + W5
            ],
            out_specs=pl.BlockSpec((1, tile_b), lambda i: (0, i)),
        ),
        compiler_params=pltpu.CompilerParams(
            dimension_semantics=("parallel",)),                      # megacore
    )(x_pad, w1_pack, wmid_pack, misc_pack)

    return out[0, :B].reshape(B, 1)                                  # (B, 1)


def init_params(key, input_size, hidden=HIDDEN):
    """PyTorch-layout params: W is (out_features, in_features), b is (out,)."""
    sizes = [(input_size, hidden), (hidden, hidden), (hidden, hidden),
             (hidden, hidden), (hidden, 1)]
    params = []
    for fan_in, fan_out in sizes:
        key, kw, kb = jax.random.split(key, 3)
        bound = 1.0 / float(jnp.sqrt(jnp.float32(fan_in)))
        w = jax.random.uniform(kw, (fan_out, fan_in), jnp.float32, -bound, bound)
        b = jax.random.uniform(kb, (fan_out,), jnp.float32, -bound, bound)
        params.append((w, b))
    return params


def reference_forward(x, params):
    """Pure-JAX reference matching the torch module."""
    x = x.astype(jnp.float32)
    x_curr = x[:, -1:]
    h = x
    for i, (w, b) in enumerate(params):
        h = h @ w.T + b
        if i < len(params) - 1:
            h = jnp.maximum(h, 0.0)
    return x_curr + h


if __name__ == "__main__":
    n_mem = 7                      # -> input_size = 8
    input_size = n_mem + 1

    key = jax.random.PRNGKey(0)
    key, kp = jax.random.split(key)
    params = init_params(kp, input_size)

    # Small primary shape, a non-128-multiple batch (padding path), and one
    # call with a non-128-multiple tile_b (rounding path).
    cases = [(8, 2048), (200, 2048), (200, 300)]
    for batch, tb in cases:
        key, kx = jax.random.split(key)
        x = jax.random.normal(kx, (batch, input_size), dtype=jnp.float32)

        out = resnet_forward(x, params, tile_b=tb)
        out = jax.block_until_ready(out)

        ref = reference_forward(x, params)
        assert out.shape == (batch, 1), out.shape
        assert jnp.allclose(out, ref, atol=1e-4, rtol=1e-4), (
            float(jnp.max(jnp.abs(out - ref))))

    print("KERNEL_OK")
</pallas_src>

<mosaic_0001>
module attributes {stable_mosaic.version = 11 : i64} {
  func.func @_resnet_kernel(%arg0: i32, %arg1: memref<128x8xf32, #tpu.memory_space<vmem>>, %arg2: memref<32x8xf32, #tpu.memory_space<vmem>>, %arg3: memref<3x32x32xf32, #tpu.memory_space<vmem>>, %arg4: memref<32x8xf32, #tpu.memory_space<vmem>>, %arg5: memref<1x128xf32, #tpu.memory_space<vmem>>) attributes {dimension_semantics = [#tpu.dimension_semantics<parallel>], iteration_bounds = array<i64: 1>, scalar_prefetch = 0 : i64, scratch_operands = 0 : i64, tpu.core_type = #tpu.core_type<tc>, window_params = [{transform_indices = @transform_0, window_bounds = array<i64: 128, 8>}, {pipeline_mode = #tpu.pipeline_mode<synchronous>, transform_indices = @transform_1, window_bounds = array<i64: 32, 8>}, {pipeline_mode = #tpu.pipeline_mode<synchronous>, transform_indices = @transform_2, window_bounds = array<i64: 3, 32, 32>}, {pipeline_mode = #tpu.pipeline_mode<synchronous>, transform_indices = @transform_3, window_bounds = array<i64: 32, 8>}, {transform_indices = @transform_4, window_bounds = array<i64: 1, 128>}]} {
    %c0 = arith.constant 0 : index
    %c0_0 = arith.constant 0 : index
    %0 = vector.load %arg1[%c0, %c0_0] : memref<128x8xf32, #tpu.memory_space<vmem>>, vector<128x8xf32>
    %c0_1 = arith.constant 0 : index
    %c0_2 = arith.constant 0 : index
    %1 = vector.load %arg4[%c0_1, %c0_2] : memref<32x8xf32, #tpu.memory_space<vmem>>, vector<32x8xf32>
    %2 = vector.extract_strided_slice %1 {offsets = [0, 0], sizes = [32, 1], strides = [1, 1]} : vector<32x8xf32> to vector<32x1xf32>
    %3 = vector.extract_strided_slice %1 {offsets = [0, 1], sizes = [32, 1], strides = [1, 1]} : vector<32x8xf32> to vector<32x1xf32>
    %4 = vector.extract_strided_slice %1 {offsets = [0, 2], sizes = [32, 1], strides = [1, 1]} : vector<32x8xf32> to vector<32x1xf32>
    %5 = vector.extract_strided_slice %1 {offsets = [0, 3], sizes = [32, 1], strides = [1, 1]} : vector<32x8xf32> to vector<32x1xf32>
    %6 = vector.extract_strided_slice %1 {offsets = [0, 4], sizes = [1, 1], strides = [1, 1]} : vector<32x8xf32> to vector<1x1xf32>
    %7 = vector.extract_strided_slice %1 {offsets = [0, 5], sizes = [32, 1], strides = [1, 1]} : vector<32x8xf32> to vector<32x1xf32>
    %c0_3 = arith.constant 0 : index
    %c0_4 = arith.constant 0 : index
    %8 = vector.load %arg2[%c0_3, %c0_4] : memref<32x8xf32, #tpu.memory_space<vmem>>, vector<32x8xf32>
    %cst = arith.constant dense<0.000000e+00> : vector<32x128xf32>
    %9 = tpu.matmul %8, %0, %cst {dimension_numbers = #tpu.dot_dimension_numbers<[1], [1], [0], [0], [0, 0, 1, 0], [], []>} : vector<32x8xf32>, vector<128x8xf32>, vector<32x128xf32> -> vector<32x128xf32>
    %10 = vector.broadcast %2 : vector<32x1xf32> to vector<32x128xf32>
    %11 = arith.addf %9, %10 : vector<32x128xf32>
    %12 = vector.extract_strided_slice %11 {offsets = [30, 0], sizes = [1, 128], strides = [1, 1]} : vector<32x128xf32> to vector<1x128xf32>
    %cst_5 = arith.constant 0.000000e+00 : f32
    %13 = vector.broadcast %cst_5 : f32 to vector<32x128xf32>
    %14 = arith.maximumf %11, %13 : vector<32x128xf32>
    %c0_6 = arith.constant 0 : index
    %c0_7 = arith.constant 0 : index
    %c0_8 = arith.constant 0 : index
    %15 = vector.load %arg3[%c0_6, %c0_7, %c0_8] : memref<3x32x32xf32, #tpu.memory_space<vmem>>, vector<1x32x32xf32>
    %16 = vector.shape_cast %15 : vector<1x32x32xf32> to vector<32x32xf32>
    %cst_9 = arith.constant dense<0.000000e+00> : vector<32x128xf32>
    %17 = tpu.matmul %16, %14, %cst_9 {dimension_numbers = #tpu.dot_dimension_numbers<[1], [0], [0], [1], [0, 0, 1, 1], [], []>} : vector<32x32xf32>, vector<32x128xf32>, vector<32x128xf32> -> vector<32x128xf32>
    %18 = vector.broadcast %3 : vector<32x1xf32> to vector<32x128xf32>
    %19 = arith.addf %17, %18 : vector<32x128xf32>
    %cst_10 = arith.constant 0.000000e+00 : f32
    %20 = vector.broadcast %cst_10 : f32 to vector<32x128xf32>
    %21 = arith.maximumf %19, %20 : vector<32x128xf32>
    %c1 = arith.constant 1 : index
    %c0_11 = arith.constant 0 : index
    %c0_12 = arith.constant 0 : index
    %22 = vector.load %arg3[%c1, %c0_11, %c0_12] : memref<3x32x32xf32, #tpu.memory_space<vmem>>, vector<1x32x32xf32>
    %23 = vector.shape_cast %22 : vector<1x32x32xf32> to vector<32x32xf32>
    %cst_13 = arith.constant dense<0.000000e+00> : vector<32x128xf32>
    %24 = tpu.matmul %23, %21, %cst_13 {dimension_numbers = #tpu.dot_dimension_numbers<[1], [0], [0], [1], [0, 0, 1, 1], [], []>} : vector<32x32xf32>, vector<32x128xf32>, vector<32x128xf32> -> vector<32x128xf32>
    %25 = vector.broadcast %4 : vector<32x1xf32> to vector<32x128xf32>
    %26 = arith.addf %24, %25 : vector<32x128xf32>
    %cst_14 = arith.constant 0.000000e+00 : f32
    %27 = vector.broadcast %cst_14 : f32 to vector<32x128xf32>
    %28 = arith.maximumf %26, %27 : vector<32x128xf32>
    %c2 = arith.constant 2 : index
    %c0_15 = arith.constant 0 : index
    %c0_16 = arith.constant 0 : index
    %29 = vector.load %arg3[%c2, %c0_15, %c0_16] : memref<3x32x32xf32, #tpu.memory_space<vmem>>, vector<1x32x32xf32>
    %30 = vector.shape_cast %29 : vector<1x32x32xf32> to vector<32x32xf32>
    %cst_17 = arith.constant dense<0.000000e+00> : vector<32x128xf32>
    %31 = tpu.matmul %30, %28, %cst_17 {dimension_numbers = #tpu.dot_dimension_numbers<[1], [0], [0], [1], [0, 0, 1, 1], [], []>} : vector<32x32xf32>, vector<32x128xf32>, vector<32x128xf32> -> vector<32x128xf32>
    %32 = vector.broadcast %5 : vector<32x1xf32> to vector<32x128xf32>
    %33 = arith.addf %31, %32 : vector<32x128xf32>
    %cst_18 = arith.constant 0.000000e+00 : f32
    %34 = vector.broadcast %cst_18 : f32 to vector<32x128xf32>
    %35 = arith.maximumf %33, %34 : vector<32x128xf32>
    %36 = vector.broadcast %7 : vector<32x1xf32> to vector<32x128xf32>
    %37 = arith.mulf %36, %35 : vector<32x128xf32>
    %cst_19 = arith.constant dense<0.000000e+00> : vector<128xf32>
    %38 = vector.multi_reduction <add>, %37, %cst_19 [0] : vector<32x128xf32> to vector<128xf32>
    %39 = vector.shape_cast %38 : vector<128xf32> to vector<1x128xf32>
    %40 = vector.broadcast %6 : vector<1x1xf32> to vector<1x128xf32>
    %41 = arith.addf %39, %40 : vector<1x128xf32>
    %42 = arith.addf %12, %41 : vector<1x128xf32>
    %c0_20 = arith.constant 0 : index
    %c0_21 = arith.constant 0 : index
    %43 = vector.load %arg5[%c0_20, %c0_21] : memref<1x128xf32, #tpu.memory_space<vmem>>, vector<1x128xf32>
    tpu.vector_store %arg5[%c0_20, %c0_21], %42 {strides = array<i32>} : memref<1x128xf32, #tpu.memory_space<vmem>>, vector<1x128xf32>,
    return
  }
  func.func @transform_0(%arg0: i32) -> (i32, i32) {
    %c0_i32 = arith.constant 0 : i32
    %c0_i32_0 = arith.constant 0 : i32
    return %arg0, %c0_i32 : i32, i32
  }
  func.func @transform_1(%arg0: i32) -> (i32, i32) {
    %c0_i32 = arith.constant 0 : i32
    %c0_i32_0 = arith.constant 0 : i32
    %c0_i32_1 = arith.constant 0 : i32
    return %c0_i32, %c0_i32_0 : i32, i32
  }
  func.func @transform_2(%arg0: i32) -> (i32, i32, i32) {
    %c0_i32 = arith.constant 0 : i32
    %c0_i32_0 = arith.constant 0 : i32
    %c0_i32_1 = arith.constant 0 : i32
    %c0_i32_2 = arith.constant 0 : i32
    return %c0_i32, %c0_i32_0, %c0_i32_1 : i32, i32, i32
  }
  func.func @transform_3(%arg0: i32) -> (i32, i32) {
    %c0_i32 = arith.constant 0 : i32
    %c0_i32_0 = arith.constant 0 : i32
    %c0_i32_1 = arith.constant 0 : i32
    return %c0_i32, %c0_i32_0 : i32, i32
  }
  func.func @transform_4(%arg0: i32) -> (i32, i32) {
    %c0_i32 = arith.constant 0 : i32
    %c0_i32_0 = arith.constant 0 : i32
    return %c0_i32, %arg0 : i32, i32
  }
}

</mosaic_0001>

<llo_original>
// kernel: tpu_custom_call.1
$region0: #{tpu_custom_call.1}
  #allocation0 [shape = 'u32[]', space=smem, size = 0x4, offset = 0x4, fixed_abs, tag = 'smem constant byte address 0x4 - core index']
  #allocation1 [shape = 'u32[144,128]{1,0:T(1,128)}', space=vmem, size = 0x12000, scoped, tag = 'internal scratch']
  %s0 = inlined_call_operand.vmem [shape: f32[128,8], index: 0, kind: input, shape index: {}]
  %s1 = inlined_call_operand.vmem [shape: f32[32,8], index: 1, kind: input, shape index: {}]
  %s2 = inlined_call_operand.vmem [shape: f32[3,32,32], index: 2, kind: input, shape index: {}]
  %s3 = inlined_call_operand.vmem [shape: f32[32,8], index: 3, kind: input, shape index: {}]
  %s4 = inlined_call_operand.hbm [shape: f32[1,128], index: 4, kind: output, shape index: {}]
  %s5 = sld [smem:[#allocation0]]
  $region26: #{tpu_custom_call.1} parent=0
    _
  %s7 = ssub.s32 1, %s5
  %s8 = scalar_select 0, %s7, %s5
  $region1: #{tpu_custom_call.1} parent=0
    #allocation2 [shape = 'u8[512]{0}', space=vmem, size = 0x400, scoped, tag = 'output window, operand 0, single buffered']
    #allocation3 [shape = 's32[1]{0}', space=sflag, size = 0x4, scoped, tag = 'scoped memory for tpu_custom_call.1']
    %9 = vsyncpa [#allocation3], 0
    // Predicated region
    $region2: #{tpu_custom_call.1} parent=1 // pred_check
      _
    $region3: #{tpu_custom_call.1} parent=1 // pred_check_branch
      %11 = sbr.rel (0) target = $region5
    $region4: #{tpu_custom_call.1} parent=1 // pred_region
      _
    $region5: #{tpu_custom_call.1} parent=1 // pred_fallthru
      _
    // Predicated region
    $region6: #{tpu_custom_call.1} parent=1 // pred_check
      _
    $region7: #{tpu_custom_call.1} parent=1 // pred_check_branch
      %13 = sbr.rel (0) target = $region9
    $region8: #{tpu_custom_call.1} parent=1 // pred_region
      _
    $region9: #{tpu_custom_call.1} parent=1 // pred_fallthru
      _
    // Predicated region
    $region10: #{tpu_custom_call.1} parent=1 // pred_check
      _
    $region11: #{tpu_custom_call.1} parent=1 // pred_check_branch
      %15 = sbr.rel (0) target = $region13
    $region12: #{tpu_custom_call.1} parent=1 // pred_region
      _
    $region13: #{tpu_custom_call.1} parent=1 // pred_fallthru
      _
    // Predicated region
    $region14: #{tpu_custom_call.1} parent=1 // pred_check
      _
    $region15: #{tpu_custom_call.1} parent=1 // pred_check_branch
      %17 = sbr.rel (0) target = $region17
    $region16: #{tpu_custom_call.1} parent=1 // pred_region
      _
    $region17: #{tpu_custom_call.1} parent=1 // pred_fallthru
      _
    %v18 = vld [vmem:[%s0] sm:$0xff]
    %v19 = vld [vmem:[%s0 + $0x8] sm:$0xff]
    %v20 = vld [vmem:[%s0 + $0x10] sm:$0xff]
    %v21 = vld [vmem:[%s0 + $0x18] sm:$0xff]
    %v22 = vld [vmem:[%s0 + $0x20] sm:$0xff]
    %v23 = vld [vmem:[%s0 + $0x28] sm:$0xff]
    %v24 = vld [vmem:[%s0 + $0x30] sm:$0xff]
    %v25 = vld [vmem:[%s0 + $0x38] sm:$0xff]
    %v26 = vld [vmem:[%s0 + $0x40] sm:$0xff]
    %v27 = vld [vmem:[%s0 + $0x48] sm:$0xff]
    %v28 = vld [vmem:[%s0 + $0x50] sm:$0xff]
    %v29 = vld [vmem:[%s0 + $0x58] sm:$0xff]
    %v30 = vld [vmem:[%s0 + $0x60] sm:$0xff]
    %v31 = vld [vmem:[%s0 + $0x68] sm:$0xff]
    %v32 = vld [vmem:[%s0 + $0x70] sm:$0xff]
    %v33 = vld [vmem:[%s0 + $0x78] sm:$0xff]
    %v34 = vld [vmem:[%s3] sm:$0xff]
    %v35 = vld [vmem:[%s3 + $0x8] sm:$0xff]
    %v36 = vld [vmem:[%s3 + $0x10] sm:$0xff]
    %v37 = vld [vmem:[%s3 + $0x18] sm:$0xff]
    %v38 = vld [vmem:[%s1] sm:$0xff]
    %v39 = vld [vmem:[%s1 + $0x8] sm:$0xff]
    %v40 = vld [vmem:[%s1 + $0x10] sm:$0xff]
    %v41 = vld [vmem:[%s1 + $0x18] sm:$0xff]
    %43 = vset.pattern.permute.xlu0 0
    %44 = vperm.xlu0 %43, %v34
    %v45 = vpop.permute.xlu0 %44
    %48 = vset.pattern.permute.xlu0 0
    %49 = vperm.xlu0 %48, %v35
    %v50 = vpop.permute.xlu0 %49
    %53 = vset.pattern.permute.xlu0 0
    %54 = vperm.xlu0 %53, %v36
    %v55 = vpop.permute.xlu0 %54
    %58 = vset.pattern.permute.xlu0 0
    %59 = vperm.xlu0 %58, %v37
    %v60 = vpop.permute.xlu0 %59
    %vm62 = vcmask 64512
    %v64 = vsel %vm62, %v38, 0
    %v67 = vsel %vm62, %v39, 0
    %v70 = vsel %vm62, %v40, 0
    %v73 = vsel %vm62, %v41, 0
    %v76 = vsel %vm62, %v18, 0
    %v79 = vsel %vm62, %v19, 0
    %v82 = vsel %vm62, %v20, 0
    %v85 = vsel %vm62, %v21, 0
    %v88 = vsel %vm62, %v22, 0
    %v91 = vsel %vm62, %v23, 0
    %v94 = vsel %vm62, %v24, 0
    %v97 = vsel %vm62, %v25, 0
    %v100 = vsel %vm62, %v26, 0
    %v103 = vsel %vm62, %v27, 0
    %v106 = vsel %vm62, %v28, 0
    %v109 = vsel %vm62, %v29, 0
    %v112 = vsel %vm62, %v30, 0
    %v115 = vsel %vm62, %v31, 0
    %v118 = vsel %vm62, %v32, 0
    %v121 = vsel %vm62, %v33, 0
    %123 = vmatprep.subr.mxu0 0.0
    %124 = vmatpush1.xpose.msra.mxu0 %v121
    %125 = vmatprep.subr.mxu0 0.0
    %126 = vmatpush1.xpose.msra.mxu0 %v118
    %127 = vmatprep.subr.mxu0 0.0
    %128 = vmatpush1.xpose.msra.mxu0 %v115
    %129 = vmatprep.subr.mxu0 0.0
    %130 = vmatpush1.xpose.msra.mxu0 %v112
    %131 = vmatprep.subr.mxu0 0.0
    %132 = vmatpush1.xpose.msra.mxu0 %v109
    %133 = vmatprep.subr.mxu0 0.0
    %134 = vmatpush1.xpose.msra.mxu0 %v106
    %135 = vmatprep.subr.mxu0 0.0
    %136 = vmatpush1.xpose.msra.mxu0 %v103
    %137 = vmatprep.subr.mxu0 0.0
    %138 = vmatpush1.xpose.msra.mxu0 %v100
    %139 = vmatprep.subr.mxu0 0.0
    %140 = vmatpush1.xpose.msra.mxu0 %v97
    %141 = vmatprep.subr.mxu0 0.0
    %142 = vmatpush1.xpose.msra.mxu0 %v94
    %143 = vmatprep.subr.mxu0 0.0
    %144 = vmatpush1.xpose.msra.mxu0 %v91
    %145 = vmatprep.subr.mxu0 0.0
    %146 = vmatpush1.xpose.msra.mxu0 %v88
    %147 = vmatprep.subr.mxu0 0.0
    %148 = vmatpush1.xpose.msra.mxu0 %v85
    %149 = vmatprep.subr.mxu0 0.0
    %150 = vmatpush1.xpose.msra.mxu0 %v82
    %151 = vmatprep.subr.mxu0 0.0
    %152 = vmatpush1.xpose.msra.mxu0 %v79
    %153 = vmatprep.subr.mxu0 0.0
    %154 = vmatpush1.xpose.msra.mxu0 %v76
    %155 = vmatprep.subr.mxu0 0.0
    %156 = vmatpush2.xpose.msra.mxu0 0.0
    %157 = vmatprep.subr.mxu0 0.0
    %158 = vmatpush2.xpose.msra.mxu0 0.0
    %159 = vmatprep.subr.mxu0 0.0
    %160 = vmatpush2.xpose.msra.mxu0 0.0
    %161 = vmatprep.subr.mxu0 0.0
    %162 = vmatpush2.xpose.msra.mxu0 0.0
    %163 = vmatprep.subr.mxu0 0.0
    %164 = vmatpush2.xpose.msra.mxu0 0.0
    %165 = vmatprep.subr.mxu0 0.0
    %166 = vmatpush2.xpose.msra.mxu0 0.0
    %167 = vmatprep.subr.mxu0 0.0
    %168 = vmatpush2.xpose.msra.mxu0 0.0
    %169 = vmatprep.subr.mxu0 0.0
    %170 = vmatpush2.xpose.msra.mxu0 0.0
    %171 = vmatprep.subr.mxu0 0.0
    %172 = vmatpush2.xpose.msra.mxu0 0.0
    %173 = vmatprep.subr.mxu0 0.0
    %174 = vmatpush2.xpose.msra.mxu0 0.0
    %175 = vmatprep.subr.mxu0 0.0
    %176 = vmatpush2.xpose.msra.mxu0 0.0
    %177 = vmatprep.subr.mxu0 0.0
    %178 = vmatpush2.xpose.msra.mxu0 0.0
    %179 = vmatprep.subr.mxu0 0.0
    %180 = vmatpush2.xpose.msra.mxu0 0.0
    %181 = vmatprep.subr.mxu0 0.0
    %182 = vmatpush2.xpose.msra.mxu0 0.0
    %183 = vmatprep.subr.mxu0 0.0
    %184 = vmatpush2.xpose.msra.mxu0 0.0
    %185 = vmatprep.subr.mxu0 0.0
    %186 = vmatpush2.xpose.msra.mxu0 0.0
    %187 = vmatprep.mubr.f32.mxu0 0.0
    %188 = vmatmul.mubr.f32.gmra.mxu0 %v64
    %v189 = vpop.f32.mrf.mxu0
    %v190 = vadd.f32 %v45, %v189
    %v191 = vpop.f32.mrf.mxu0
    %192 = vmatprep.mubr.f32.mxu0 0.0
    %193 = vmatmul.mubr.f32.gmra.mxu0 %v67
    %v194 = vpop.f32.mrf.mxu0
    %v195 = vadd.f32 %v50, %v194
    %v196 = vpop.f32.mrf.mxu0
    %197 = vmatprep.mubr.f32.mxu0 0.0
    %198 = vmatmul.mubr.f32.gmra.mxu0 %v70
    %v199 = vpop.f32.mrf.mxu0
    %v200 = vadd.f32 %v55, %v199
    %v201 = vpop.f32.mrf.mxu0
    %202 = vmatprep.mubr.f32.mxu0 0.0
    %203 = vmatmul.mubr.f32.gmra.mxu0 %v73
    %v204 = vpop.f32.mrf.mxu0
    %v205 = vadd.f32 %v60, %v204
    %v206 = vpop.f32.mrf.mxu0
    %207 = vdwg.mxu0
    %v208 = vmax.f32 %v190, 0.0
    %v209 = vmax.f32 %v195, 0.0
    %v210 = vmax.f32 %v200, 0.0
    %v211 = vmax.f32 %v205, 0.0
    %v212 = vld [vmem:[%s2] sm:$0xff]
    %v213 = vld [vmem:[%s2 + $0x8] sm:$0xff]
    %v214 = vld [vmem:[%s2 + $0x10] sm:$0xff]
    %v215 = vld [vmem:[%s2 + $0x18] sm:$0xff]
    %216 = vset.pattern.permute.xlu0 1
    %217 = vperm.xlu0 %216, %v34
    %v218 = vpop.permute.xlu0 %217
    %220 = vset.pattern.permute.xlu0 1
    %221 = vperm.xlu0 %220, %v35
    %v222 = vpop.permute.xlu0 %221
    %224 = vset.pattern.permute.xlu0 1
    %225 = vperm.xlu0 %224, %v36
    %v226 = vpop.permute.xlu0 %225
    %228 = vset.pattern.permute.xlu0 1
    %229 = vperm.xlu0 %228, %v37
    %v230 = vpop.permute.xlu0 %229
    %vm232 = vcmask 261120
    %v234 = vsel %vm232, %v212, 0
    %v237 = vsel %vm232, %v213, 0
    %v240 = vsel %vm232, %v214, 0
    %v243 = vsel %vm232, %v215, 0
    %245 = vmatprep.subr.mxu0 0.0
    %246 = vmatpush1.msra.mxu0 0.0
    %247 = vmatprep.subr.mxu0 0.0
    %248 = vmatpush1.msra.mxu0 0.0
    %249 = vmatprep.subr.mxu0 0.0
    %250 = vmatpush1.msra.mxu0 0.0
    %251 = vmatprep.subr.mxu0 0.0
    %252 = vmatpush1.msra.mxu0 0.0
    %253 = vmatprep.subr.mxu0 0.0
    %254 = vmatpush1.msra.mxu0 0.0
    %255 = vmatprep.subr.mxu0 0.0
    %256 = vmatpush1.msra.mxu0 0.0
    %257 = vmatprep.subr.mxu0 0.0
    %258 = vmatpush1.msra.mxu0 0.0
    %259 = vmatprep.subr.mxu0 0.0
    %260 = vmatpush1.msra.mxu0 0.0
    %261 = vmatprep.subr.mxu0 0.0
    %262 = vmatpush1.msra.mxu0 0.0
    %263 = vmatprep.subr.mxu0 0.0
    %264 = vmatpush1.msra.mxu0 0.0
    %265 = vmatprep.subr.mxu0 0.0
    %266 = vmatpush1.msra.mxu0 0.0
    %267 = vmatprep.subr.mxu0 0.0
    %268 = vmatpush1.msra.mxu0 0.0
    %269 = vmatprep.subr.mxu0 0.0
    %270 = vmatpush1.msra.mxu0 %v211
    %271 = vmatprep.subr.mxu0 0.0
    %272 = vmatpush1.msra.mxu0 %v210
    %273 = vmatprep.subr.mxu0 0.0
    %274 = vmatpush1.msra.mxu0 %v209
    %275 = vmatprep.subr.mxu0 0.0
    %276 = vmatpush1.msra.mxu0 %v208
    %277 = vmatprep.subr.mxu0 0.0
    %278 = vmatpush2.msra.mxu0 0.0
    %279 = vmatprep.subr.mxu0 0.0
    %280 = vmatpush2.msra.mxu0 0.0
    %281 = vmatprep.subr.mxu0 0.0
    %282 = vmatpush2.msra.mxu0 0.0
    %283 = vmatprep.subr.mxu0 0.0
    %284 = vmatpush2.msra.mxu0 0.0
    %285 = vmatprep.subr.mxu0 0.0
    %286 = vmatpush2.msra.mxu0 0.0
    %287 = vmatprep.subr.mxu0 0.0
    %288 = vmatpush2.msra.mxu0 0.0
    %289 = vmatprep.subr.mxu0 0.0
    %290 = vmatpush2.msra.mxu0 0.0
    %291 = vmatprep.subr.mxu0 0.0
    %292 = vmatpush2.msra.mxu0 0.0
    %293 = vmatprep.subr.mxu0 0.0
    %294 = vmatpush2.msra.mxu0 0.0
    %295 = vmatprep.subr.mxu0 0.0
    %296 = vmatpush2.msra.mxu0 0.0
    %297 = vmatprep.subr.mxu0 0.0
    %298 = vmatpush2.msra.mxu0 0.0
    %299 = vmatprep.subr.mxu0 0.0
    %300 = vmatpush2.msra.mxu0 0.0
    %301 = vmatprep.subr.mxu0 0.0
    %302 = vmatpush2.msra.mxu0 0.0
    %303 = vmatprep.subr.mxu0 0.0
    %304 = vmatpush2.msra.mxu0 0.0
    %305 = vmatprep.subr.mxu0 0.0
    %306 = vmatpush2.msra.mxu0 0.0
    %307 = vmatprep.subr.mxu0 0.0
    %308 = vmatpush2.msra.mxu0 0.0
    %309 = vmatprep.mubr.f32.mxu0 0.0
    %310 = vmatmul.mubr.f32.gmra.mxu0 %v234
    %v311 = vpop.f32.mrf.mxu0
    %v312 = vadd.f32 %v218, %v311
    %v313 = vpop.f32.mrf.mxu0
    %314 = vmatprep.mubr.f32.mxu0 0.0
    %315 = vmatmul.mubr.f32.gmra.mxu0 %v237
    %v316 = vpop.f32.mrf.mxu0
    %v317 = vadd.f32 %v222, %v316
    %v318 = vpop.f32.mrf.mxu0
    %319 = vmatprep.mubr.f32.mxu0 0.0
    %320 = vmatmul.mubr.f32.gmra.mxu0 %v240
    %v321 = vpop.f32.mrf.mxu0
    %v322 = vadd.f32 %v226, %v321
    %v323 = vpop.f32.mrf.mxu0
    %324 = vmatprep.mubr.f32.mxu0 0.0
    %325 = vmatmul.mubr.f32.gmra.mxu0 %v243
    %v326 = vpop.f32.mrf.mxu0
    %v327 = vadd.f32 %v230, %v326
    %v328 = vpop.f32.mrf.mxu0
    %329 = vdwg.mxu0
    %v330 = vmax.f32 %v312, 0.0
    %v331 = vmax.f32 %v317, 0.0
    %v332 = vmax.f32 %v322, 0.0
    %v333 = vmax.f32 %v327, 0.0
    %s334 = scalar_lea.vmem %s2, 32
    %v335 = vld [vmem:[%s334] sm:$0xff]
    %v336 = vld [vmem:[%s334 + $0x8] sm:$0xff]
    %v337 = vld [vmem:[%s334 + $0x10] sm:$0xff]
    %v338 = vld [vmem:[%s334 + $0x18] sm:$0xff]
    %339 = vset.pattern.permute.xlu0 2
    %340 = vperm.xlu0 %339, %v34
    %v341 = vpop.permute.xlu0 %340
    %343 = vset.pattern.permute.xlu0 2
    %344 = vperm.xlu0 %343, %v35
    %v345 = vpop.permute.xlu0 %344
    %347 = vset.pattern.permute.xlu0 2
    %348 = vperm.xlu0 %347, %v36
    %v349 = vpop.permute.xlu0 %348
    %351 = vset.pattern.permute.xlu0 2
    %352 = vperm.xlu0 %351, %v37
    %v353 = vpop.permute.xlu0 %352
    %v356 = vsel %vm232, %v335, 0
    %v359 = vsel %vm232, %v336, 0
    %v362 = vsel %vm232, %v337, 0
    %v365 = vsel %vm232, %v338, 0
    %367 = vmatprep.subr.mxu0 0.0
    %368 = vmatpush1.msra.mxu0 0.0
    %369 = vmatprep.subr.mxu0 0.0
    %370 = vmatpush1.msra.mxu0 0.0
    %371 = vmatprep.subr.mxu0 0.0
    %372 = vmatpush1.msra.mxu0 0.0
    %373 = vmatprep.subr.mxu0 0.0
    %374 = vmatpush1.msra.mxu0 0.0
    %375 = vmatprep.subr.mxu0 0.0
    %376 = vmatpush1.msra.mxu0 0.0
    %377 = vmatprep.subr.mxu0 0.0
    %378 = vmatpush1.msra.mxu0 0.0
    %379 = vmatprep.subr.mxu0 0.0
    %380 = vmatpush1.msra.mxu0 0.0
    %381 = vmatprep.subr.mxu0 0.0
    %382 = vmatpush1.msra.mxu0 0.0
    %383 = vmatprep.subr.mxu0 0.0
    %384 = vmatpush1.msra.mxu0 0.0
    %385 = vmatprep.subr.mxu0 0.0
    %386 = vmatpush1.msra.mxu0 0.0
    %387 = vmatprep.subr.mxu0 0.0
    %388 = vmatpush1.msra.mxu0 0.0
    %389 = vmatprep.subr.mxu0 0.0
    %390 = vmatpush1.msra.mxu0 0.0
    %391 = vmatprep.subr.mxu0 0.0
    %392 = vmatpush1.msra.mxu0 %v333
    %393 = vmatprep.subr.mxu0 0.0
    %394 = vmatpush1.msra.mxu0 %v332
    %395 = vmatprep.subr.mxu0 0.0
    %396 = vmatpush1.msra.mxu0 %v331
    %397 = vmatprep.subr.mxu0 0.0
    %398 = vmatpush1.msra.mxu0 %v330
    %399 = vmatprep.subr.mxu0 0.0
    %400 = vmatpush2.msra.mxu0 0.0
    %401 = vmatprep.subr.mxu0 0.0
    %402 = vmatpush2.msra.mxu0 0.0
    %403 = vmatprep.subr.mxu0 0.0
    %404 = vmatpush2.msra.mxu0 0.0
    %405 = vmatprep.subr.mxu0 0.0
    %406 = vmatpush2.msra.mxu0 0.0
    %407 = vmatprep.subr.mxu0 0.0
    %408 = vmatpush2.msra.mxu0 0.0
    %409 = vmatprep.subr.mxu0 0.0
    %410 = vmatpush2.msra.mxu0 0.0
    %411 = vmatprep.subr.mxu0 0.0
    %412 = vmatpush2.msra.mxu0 0.0
    %413 = vmatprep.subr.mxu0 0.0
    %414 = vmatpush2.msra.mxu0 0.0
    %415 = vmatprep.subr.mxu0 0.0
    %416 = vmatpush2.msra.mxu0 0.0
    %417 = vmatprep.subr.mxu0 0.0
    %418 = vmatpush2.msra.mxu0 0.0
    %419 = vmatprep.subr.mxu0 0.0
    %420 = vmatpush2.msra.mxu0 0.0
    %421 = vmatprep.subr.mxu0 0.0
    %422 = vmatpush2.msra.mxu0 0.0
    %423 = vmatprep.subr.mxu0 0.0
    %424 = vmatpush2.msra.mxu0 0.0
    %425 = vmatprep.subr.mxu0 0.0
    %426 = vmatpush2.msra.mxu0 0.0
    %427 = vmatprep.subr.mxu0 0.0
    %428 = vmatpush2.msra.mxu0 0.0
    %429 = vmatprep.subr.mxu0 0.0
    %430 = vmatpush2.msra.mxu0 0.0
    %431 = vmatprep.mubr.f32.mxu0 0.0
    %432 = vmatmul.mubr.f32.gmra.mxu0 %v356
    %v433 = vpop.f32.mrf.mxu0
    %v434 = vadd.f32 %v341, %v433
    %v435 = vpop.f32.mrf.mxu0
    %436 = vmatprep.mubr.f32.mxu0 0.0
    %437 = vmatmul.mubr.f32.gmra.mxu0 %v359
    %v438 = vpop.f32.mrf.mxu0
    %v439 = vadd.f32 %v345, %v438
    %v440 = vpop.f32.mrf.mxu0
    %441 = vmatprep.mubr.f32.mxu0 0.0
    %442 = vmatmul.mubr.f32.gmra.mxu0 %v362
    %v443 = vpop.f32.mrf.mxu0
    %v444 = vadd.f32 %v349, %v443
    %v445 = vpop.f32.mrf.mxu0
    %446 = vmatprep.mubr.f32.mxu0 0.0
    %447 = vmatmul.mubr.f32.gmra.mxu0 %v365
    %v448 = vpop.f32.mrf.mxu0
    %v449 = vadd.f32 %v353, %v448
    %v450 = vpop.f32.mrf.mxu0
    %451 = vdwg.mxu0
    %v452 = vmax.f32 %v434, 0.0
    %v453 = vmax.f32 %v439, 0.0
    %v454 = vmax.f32 %v444, 0.0
    %v455 = vmax.f32 %v449, 0.0
    %s456 = scalar_lea.vmem %s2, 64
    %v457 = vld [vmem:[%s456] sm:$0xff]
    %v458 = vld [vmem:[%s456 + $0x8] sm:$0xff]
    %v459 = vld [vmem:[%s456 + $0x10] sm:$0xff]
    %v460 = vld [vmem:[%s456 + $0x18] sm:$0xff]
    %461 = vset.pattern.permute.xlu0 3
    %462 = vperm.xlu0 %461, %v34
    %v463 = vpop.permute.xlu0 %462
    %465 = vset.pattern.permute.xlu0 3
    %466 = vperm.xlu0 %465, %v35
    %v467 = vpop.permute.xlu0 %466
    %469 = vset.pattern.permute.xlu0 3
    %470 = vperm.xlu0 %469, %v36
    %v471 = vpop.permute.xlu0 %470
    %473 = vset.pattern.permute.xlu0 3
    %474 = vperm.xlu0 %473, %v37
    %v475 = vpop.permute.xlu0 %474
    %v478 = vsel %vm232, %v457, 0
    %v481 = vsel %vm232, %v458, 0
    %v484 = vsel %vm232, %v459, 0
    %v487 = vsel %vm232, %v460, 0
    %489 = vmatprep.subr.mxu0 0.0
    %490 = vmatpush1.msra.mxu0 0.0
    %491 = vmatprep.subr.mxu0 0.0
    %492 = vmatpush1.msra.mxu0 0.0
    %493 = vmatprep.subr.mxu0 0.0
    %494 = vmatpush1.msra.mxu0 0.0
    %495 = vmatprep.subr.mxu0 0.0
    %496 = vmatpush1.msra.mxu0 0.0
    %497 = vmatprep.subr.mxu0 0.0
    %498 = vmatpush1.msra.mxu0 0.0
    %499 = vmatprep.subr.mxu0 0.0
    %500 = vmatpush1.msra.mxu0 0.0
    %501 = vmatprep.subr.mxu0 0.0
    %502 = vmatpush1.msra.mxu0 0.0
    %503 = vmatprep.subr.mxu0 0.0
    %504 = vmatpush1.msra.mxu0 0.0
    %505 = vmatprep.subr.mxu0 0.0
    %506 = vmatpush1.msra.mxu0 0.0
    %507 = vmatprep.subr.mxu0 0.0
    %508 = vmatpush1.msra.mxu0 0.0
    %509 = vmatprep.subr.mxu0 0.0
    %510 = vmatpush1.msra.mxu0 0.0
    %511 = vmatprep.subr.mxu0 0.0
    %512 = vmatpush1.msra.mxu0 0.0
    %513 = vmatprep.subr.mxu0 0.0
    %514 = vmatpush1.msra.mxu0 %v455
    %515 = vmatprep.subr.mxu0 0.0
    %516 = vmatpush1.msra.mxu0 %v454
    %517 = vmatprep.subr.mxu0 0.0
    %518 = vmatpush1.msra.mxu0 %v453
    %519 = vmatprep.subr.mxu0 0.0
    %520 = vmatpush1.msra.mxu0 %v452
    %521 = vmatprep.subr.mxu0 0.0
    %522 = vmatpush2.msra.mxu0 0.0
    %523 = vmatprep.subr.mxu0 0.0
    %524 = vmatpush2.msra.mxu0 0.0
    %525 = vmatprep.subr.mxu0 0.0
    %526 = vmatpush2.msra.mxu0 0.0
    %527 = vmatprep.subr.mxu0 0.0
    %528 = vmatpush2.msra.mxu0 0.0
    %529 = vmatprep.subr.mxu0 0.0
    %530 = vmatpush2.msra.mxu0 0.0
    %531 = vmatprep.subr.mxu0 0.0
    %532 = vmatpush2.msra.mxu0 0.0
    %533 = vmatprep.subr.mxu0 0.0
    %534 = vmatpush2.msra.mxu0 0.0
    %535 = vmatprep.subr.mxu0 0.0
    %536 = vmatpush2.msra.mxu0 0.0
    %537 = vmatprep.subr.mxu0 0.0
    %538 = vmatpush2.msra.mxu0 0.0
    %539 = vmatprep.subr.mxu0 0.0
    %540 = vmatpush2.msra.mxu0 0.0
    %541 = vmatprep.subr.mxu0 0.0
    %542 = vmatpush2.msra.mxu0 0.0
    %543 = vmatprep.subr.mxu0 0.0
    %544 = vmatpush2.msra.mxu0 0.0
    %545 = vmatprep.subr.mxu0 0.0
    %546 = vmatpush2.msra.mxu0 0.0
    %547 = vmatprep.subr.mxu0 0.0
    %548 = vmatpush2.msra.mxu0 0.0
    %549 = vmatprep.subr.mxu0 0.0
    %550 = vmatpush2.msra.mxu0 0.0
    %551 = vmatprep.subr.mxu0 0.0
    %552 = vmatpush2.msra.mxu0 0.0
    %553 = vmatprep.mubr.f32.mxu0 0.0
    %554 = vmatmul.mubr.f32.gmra.mxu0 %v478
    %v555 = vpop.f32.mrf.mxu0
    %v556 = vadd.f32 %v463, %v555
    %v557 = vpop.f32.mrf.mxu0
    %558 = vmatprep.mubr.f32.mxu0 0.0
    %559 = vmatmul.mubr.f32.gmra.mxu0 %v481
    %v560 = vpop.f32.mrf.mxu0
    %v561 = vadd.f32 %v467, %v560
    %v562 = vpop.f32.mrf.mxu0
    %563 = vmatprep.mubr.f32.mxu0 0.0
    %564 = vmatmul.mubr.f32.gmra.mxu0 %v484
    %v565 = vpop.f32.mrf.mxu0
    %v566 = vadd.f32 %v471, %v565
    %v567 = vpop.f32.mrf.mxu0
    %568 = vmatprep.mubr.f32.mxu0 0.0
    %569 = vmatmul.mubr.f32.gmra.mxu0 %v487
    %v570 = vpop.f32.mrf.mxu0
    %v571 = vadd.f32 %v475, %v570
    %v572 = vpop.f32.mrf.mxu0
    %573 = vdwg.mxu0
    %v574 = vmax.f32 %v556, 0.0
    %v575 = vmax.f32 %v561, 0.0
    %v576 = vmax.f32 %v566, 0.0
    %v577 = vmax.f32 %v571, 0.0
    %578 = vset.pattern.permute.xlu0 5
    %579 = vperm.xlu0 %578, %v34
    %v580 = vpop.permute.xlu0 %579
    %582 = vset.pattern.permute.xlu0 5
    %583 = vperm.xlu0 %582, %v35
    %v584 = vpop.permute.xlu0 %583
    %586 = vset.pattern.permute.xlu0 5
    %587 = vperm.xlu0 %586, %v36
    %v588 = vpop.permute.xlu0 %587
    %590 = vset.pattern.permute.xlu0 5
    %591 = vperm.xlu0 %590, %v37
    %v592 = vpop.permute.xlu0 %591
    %v594 = vmul.f32 %v580, %v574
    %v595 = vmul.f32 %v584, %v575
    %v596 = vmul.f32 %v588, %v576
    %v597 = vmul.f32 %v592, %v577
    %v598 = vadd.f32 %v594, %v595
    %v599 = vadd.f32 %v598, %v596
    %v600 = vadd.f32 %v599, %v597
    %v601 = vrot.slane %v600, 4
    %v602 = vadd.f32 %v600, %v601
    %v603 = vrot.slane %v602, 2
    %v604 = vadd.f32 %v602, %v603
    %v605 = vrot.slane %v604, 1
    %v606 = vadd.f32 %v604, %v605
    %607 = vset.pattern.permute.xlu0 4
    %608 = vperm.xlu0 %607, %v34
    %v609 = vpop.permute.xlu0 %608
    %v611 = vadd.f32 %v606, %v609
    %v613 = vrot.slane %v611, 2
    %v615 = vadd.f32 %v205, %v613
    %616 = vst [vmem:[#allocation2 - $0x6] sm:$0x40] %v615
    // Predicated region
    $region18: #{tpu_custom_call.1} parent=1 // pred_check
      _
    $region19: #{tpu_custom_call.1} parent=1 // pred_check_branch
      %618 = sbr.rel (0) target = $region21
    $region20: #{tpu_custom_call.1} parent=1 // pred_region
      %s620 = ssub.s32 16, 16
      %621 = vsyncadd [#allocation3], %s620
      %s623 = sshll.u32 [#allocation2], 4
      %s624 = int_to_ptr.vmem [resolvable:$true] %s623
      %626 = dma.vmem_to_hbm [thread:$0]  %s624, 16, %s4, [#allocation3]
    $region21: #{tpu_custom_call.1} parent=1 // pred_fallthru
      _
    // Predicated region
    $region22: #{tpu_custom_call.1} parent=1 // pred_check
      _
    $region23: #{tpu_custom_call.1} parent=1 // pred_check_branch
      %628 = sbr.rel (0) target = $region25
    $region24: #{tpu_custom_call.1} parent=1 // pred_region
      %629 = dma.done [#allocation3], 16
    $region25: #{tpu_custom_call.1} parent=1 // pred_fallthru
      _
    %630 = vsyncpa [#allocation3], 1

</llo_original>
